<compile_context>
chip_gen: v7x
topology: tpu7x:2x2x1
jax: 0.10.0
libtpu: 0.0.40
codegen_flags: <defaults>
</compile_context>

<pallas_src>
import functools

import jax
import jax.numpy as jnp
from jax import lax
from jax.experimental import pallas as pl
from jax.experimental.pallas import tpu as pltpu


def _round_up(x, m):
    return (x + m - 1) // m * m


def _masked_lm_kernel(meta_ref, x_ref, w_ref, b_ref, tgt_ref, loss_ref,
                      *, group_layout, n_tile, tiles_per_core):
    """One (core, N-tile) step of the fused 3-head linear + cross-entropy loss.

    meta_ref : SMEM i32[1]        -- [n_real] (true token count, pre-padding, >= 1)
    x_ref    : VMEM f32[NT, D]    -- masked-token activations (dropout == identity)
    w_ref    : VMEM f32[D, Vtot]  -- per-head weights packed into 128-lane groups
    b_ref    : VMEM f32[1, Vtot]  -- packed bias; padded columns hold -1e30 (baked mask)
    tgt_ref  : VMEM i32[NT, H]    -- per-head target as GROUP-LOCAL column index
    loss_ref : VMEM f32[8, 128]   -- per-core output block; partial loss lives in [0, 0]
    group_layout : static tuple of (col_off, group_width, ((head, local_off, v_real), ...))
    """
    c = pl.program_id(0)                      # core (N-split) index
    i = pl.program_id(1)                      # N-tile index within this core

    @pl.when(i == 0)
    def _():
        loss_ref[...] = jnp.zeros_like(loss_ref)

    x = x_ref[...]
    # One MXU matmul for all heads; padded columns get logit -1e30 via the baked bias.
    logits = jnp.dot(x, w_ref[...], preferred_element_type=jnp.float32) + b_ref[...]
    nt = logits.shape[0]

    per_row = jnp.zeros((nt, 1), jnp.float32)
    for g_off, g_w, heads in group_layout:
        lg = logits[:, g_off:g_off + g_w]                    # 128-lane-aligned slice
        # Narrow per-group iota (regenerated per group to keep the live set small).
        ch = lax.broadcasted_iota(jnp.int32, (nt, g_w), 1)
        # Joint group max >= every member head's max -> one exp serves all heads.
        m = jnp.max(lg, axis=-1, keepdims=True)              # [NT, 1]
        e = jnp.exp(lg - m)                                  # padded cols -> exactly 0
        for h, l_off, v_real in heads:
            if len(heads) == 1 and l_off == 0:
                # Single-head group: padding is already zeroed by the baked bias mask.
                s = jnp.sum(e, axis=-1, keepdims=True)
            else:
                in_h = (ch >= l_off) & (ch < l_off + v_real)
                s = jnp.sum(jnp.where(in_h, e, 0.0), axis=-1, keepdims=True)
            lse = m + jnp.log(s)                             # [NT, 1]
            # One-hot gather of the target logit (targets are group-local indices).
            t = tgt_ref[:, h:h + 1]                          # [NT, 1]
            tgt_logit = jnp.sum(jnp.where(ch == t, lg, 0.0), axis=-1, keepdims=True)
            per_row = per_row + (lse - tgt_logit)

    # Drop rows that only exist to pad N up to the tile size.
    n_real = meta_ref[0]
    row0 = (c * tiles_per_core + i) * n_tile
    row_id = row0 + lax.broadcasted_iota(jnp.int32, (nt, 1), 0)
    per_row = jnp.where(row_id < n_real, per_row, 0.0)

    # Raw accumulation into the resident output block; scale once at the end.
    loss_ref[0:1, 0:1] += jnp.sum(per_row, axis=0, keepdims=True)

    @pl.when(i == pl.num_programs(1) - 1)
    def _():
        inv_n = 1.0 / n_real.astype(jnp.float32)
        loss_ref[0:1, 0:1] = loss_ref[0:1, 0:1] * inv_n


def fused_masked_lm_loss(x, w_cat, b_cat, targets_local, group_layout):
    """x: [N, D] f32; w_cat: [D, Vtot]; b_cat: [1, Vtot]; targets_local: [N, H] i32."""
    n, d = x.shape
    v_tot = w_cat.shape[1]
    n_heads = targets_local.shape[1]

    # 256-row tiles: amortizes per-grid-step overhead; [NT, Vtot] f32 logits stay far
    # inside even v7x's 64 MiB VMEM at these vocab sizes.
    n_tile = min(256, _round_up(max(n, 1), 8))
    # v7x has 2 TensorCores: split the N axis across them when there is enough work.
    num_cores = 2 if _round_up(max(n, 1), n_tile) // n_tile >= 2 else 1
    n_pad = _round_up(max(n, 1), n_tile * num_cores)
    tiles_per_core = n_pad // (n_tile * num_cores)
    grid = (num_cores, tiles_per_core)

    x_p = jnp.pad(x.astype(jnp.float32), ((0, n_pad - n), (0, 0)))
    tg = jnp.pad(targets_local.astype(jnp.int32), ((0, n_pad - n), (0, 0)))
    meta = jnp.array([max(n, 1)], jnp.int32)            # clamp: no /0 when N == 0

    kernel = functools.partial(_masked_lm_kernel, group_layout=group_layout,
                               n_tile=n_tile, tiles_per_core=tiles_per_core)

    out = pl.pallas_call(
        kernel,
        out_shape=jax.ShapeDtypeStruct((num_cores * 8, 128), jnp.float32),
        grid_spec=pltpu.PrefetchScalarGridSpec(
            num_scalar_prefetch=1,                      # meta -> SMEM
            grid=grid,
            in_specs=[
                pl.BlockSpec((n_tile, d),
                             lambda c, i, m: (c * tiles_per_core + i, 0)),   # x tile
                pl.BlockSpec((d, v_tot), lambda c, i, m: (0, 0)),            # resident weights
                pl.BlockSpec((1, v_tot), lambda c, i, m: (0, 0)),            # resident bias
                pl.BlockSpec((n_tile, n_heads),
                             lambda c, i, m: (c * tiles_per_core + i, 0)),   # target ids
            ],
            out_specs=pl.BlockSpec((8, 128), lambda c, i, m: (c, 0)),
        ),
        compiler_params=pltpu.CompilerParams(
            # axis 0 = independent per-core N split; axis 1 carries the accumulator.
            dimension_semantics=("parallel", "arbitrary"),
            vmem_limit_bytes=48 * 1024 * 1024,
        ),
    )(meta, x_p, w_cat, b_cat, tg)
    # Sum the per-core partial means (each core scaled by 1/N already).
    return out.reshape(num_cores, 8, 128)[:, 0, 0].sum()


def init_linear_params(key, in_features, out_features):
    """Deterministic init mimicking nn.Linear (uniform +-1/sqrt(in)); W stored as [in, out]."""
    kw, kb = jax.random.split(key)
    bound = 1.0 / jnp.sqrt(jnp.float32(in_features))
    w = jax.random.uniform(kw, (in_features, out_features), jnp.float32, -bound, bound)
    b = jax.random.uniform(kb, (out_features,), jnp.float32, -bound, bound)
    return w, b


class MaskedLMPallas:
    HEADS = ("POI", "cat", "hour")
    LANES = 128

    def __init__(self, input_size, vocab_size, key):
        keys = jax.random.split(key, len(self.HEADS))
        self.params = {}
        for name, k in zip(self.HEADS, keys):
            self.params[name] = init_linear_params(k, input_size, vocab_size[name])

        # Greedy-pack heads into 128-lane groups: a head joins the previous group if it
        # fits inside that group's already-committed lane padding (so cat=16 and hour=24
        # share one 128-lane group instead of occupying 128 lanes each).
        groups = []                           # [group_used, [(head, local_off, v_real)]]
        for h, name in enumerate(self.HEADS):
            v_real = self.params[name][0].shape[1]
            if groups and groups[-1][0] + v_real <= _round_up(groups[-1][0], self.LANES):
                groups[-1][1].append((h, groups[-1][0], v_real))
                groups[-1][0] += v_real
            else:
                groups.append([v_real, [(h, 0, v_real)]])

        # Build the fused [D, Vtot] weight / [1, Vtot] bias.  Padded columns: W = 0,
        # bias = -1e30 -> their logits are -1e30 and vanish from every softmax.
        d = input_size
        layout, w_blocks, b_blocks = [], [], []
        col_off = 0
        for used, members in groups:
            g_w = _round_up(used, self.LANES)
            w_g = jnp.zeros((d, g_w), jnp.float32)
            b_g = jnp.full((g_w,), -1e30, jnp.float32)
            for h, l_off, v_real in members:
                w, b = self.params[self.HEADS[h]]
                w_g = w_g.at[:, l_off:l_off + v_real].set(w)
                b_g = b_g.at[l_off:l_off + v_real].set(b)
            w_blocks.append(w_g)
            b_blocks.append(b_g)
            layout.append((col_off, g_w, tuple(members)))
            col_off += g_w
        self.group_layout = tuple(layout)
        self.w_cat = jnp.concatenate(w_blocks, axis=1)              # [D, Vtot]
        self.b_cat = jnp.concatenate(b_blocks, axis=0)[None, :]     # [1, Vtot]

        # Group-local column offset per head (targets are rebased onto these).
        self.head_local_off = [0] * len(self.HEADS)
        for _, _, members in self.group_layout:
            for h, l_off, _ in members:
                self.head_local_off[h] = l_off

    @functools.partial(jax.jit, static_argnums=0)
    def __call__(self, masked_output, masked_target):
        # dropout == identity (eval mode)
        offs = jnp.array(self.head_local_off, jnp.int32)
        tg = jnp.stack([t.astype(jnp.int32) for t in masked_target], axis=1) + offs[None, :]
        return fused_masked_lm_loss(masked_output, self.w_cat, self.b_cat,
                                    tg, self.group_layout)


def _reference_loss(x, params, targets):
    """Plain-JAX reference (per-head mean cross-entropy, summed)."""
    total = 0.0
    for (w, b), t in zip(params, targets):
        logits = x @ w + b
        lse = jax.nn.logsumexp(logits, axis=-1)
        tl = jnp.take_along_axis(logits, t[:, None].astype(jnp.int32), axis=-1)[:, 0]
        total = total + jnp.mean(lse - tl)
    return total


if __name__ == "__main__":
    key = jax.random.PRNGKey(0)
    k_params, k_x, k_t0, k_t1, k_t2 = jax.random.split(key, 5)

    N = 8              # number of masked positions
    INPUT_SIZE = 32    # hidden size
    VOCAB = {"POI": 128, "cat": 16, "hour": 24}

    model = MaskedLMPallas(INPUT_SIZE, VOCAB, k_params)

    masked_output = jax.random.normal(k_x, (N, INPUT_SIZE), jnp.float32)
    masked_target = (
        jax.random.randint(k_t0, (N,), 0, VOCAB["POI"], jnp.int32),
        jax.random.randint(k_t1, (N,), 0, VOCAB["cat"], jnp.int32),
        jax.random.randint(k_t2, (N,), 0, VOCAB["hour"], jnp.int32),
    )

    aux_loss = model(masked_output, masked_target)
    aux_loss = jax.block_until_ready(aux_loss)

    ref = _reference_loss(
        masked_output,
        [model.params["POI"], model.params["cat"], model.params["hour"]],
        masked_target,
    )
    assert jnp.allclose(aux_loss, ref, rtol=1e-5, atol=1e-5), (aux_loss, ref)

    print("KERNEL_OK")
</pallas_src>

<mosaic_0001>
module attributes {stable_mosaic.version = 11 : i64} {
  func.func @_masked_lm_kernel(%arg0: i32, %arg1: i32, %arg2: memref<1xi32, #tpu.memory_space<smem>>, %arg3: memref<8x32xf32, #tpu.memory_space<vmem>>, %arg4: memref<32x256xf32, #tpu.memory_space<vmem>>, %arg5: memref<1x256xf32, #tpu.memory_space<vmem>>, %arg6: memref<8x3xi32, #tpu.memory_space<vmem>>, %arg7: memref<8x128xf32, #tpu.memory_space<vmem>>) attributes {dimension_semantics = [#tpu.dimension_semantics<parallel>, #tpu.dimension_semantics<arbitrary>], iteration_bounds = array<i64: 1, 1>, scalar_prefetch = 1 : i64, scratch_operands = 0 : i64, tpu.core_type = #tpu.core_type<tc>, window_params = [{transform_indices = @transform_0, window_bounds = array<i64: 8, 32>}, {pipeline_mode = #tpu.pipeline_mode<synchronous>, transform_indices = @transform_1, window_bounds = array<i64: 32, 256>}, {pipeline_mode = #tpu.pipeline_mode<synchronous>, transform_indices = @transform_2, window_bounds = array<i64: 1, 256>}, {transform_indices = @transform_3, window_bounds = array<i64: 8, 3>}, {transform_indices = @transform_4, window_bounds = array<i64: 8, 128>}]} {
    %c0_i32 = arith.constant 0 : i32
    %0 = arith.cmpi eq, %arg1, %c0_i32 : i32
    %1 = arith.extui %0 : i1 to i32
    %c0_i32_0 = arith.constant 0 : i32
    %2 = arith.cmpi ne, %1, %c0_i32_0 : i32
    scf.if %2 {
      %cst_35 = arith.constant 0.000000e+00 : f32
      %96 = vector.broadcast %cst_35 : f32 to vector<8x128xf32>
      %c0_36 = arith.constant 0 : index
      %c0_37 = arith.constant 0 : index
      %97 = vector.load %arg7[%c0_36, %c0_37] : memref<8x128xf32, #tpu.memory_space<vmem>>, vector<8x128xf32>
      tpu.vector_store %arg7[%c0_36, %c0_37], %96 {strides = array<i32>} : memref<8x128xf32, #tpu.memory_space<vmem>>, vector<8x128xf32>,
    } else {
    }
    %c0 = arith.constant 0 : index
    %c0_1 = arith.constant 0 : index
    %3 = vector.load %arg3[%c0, %c0_1] : memref<8x32xf32, #tpu.memory_space<vmem>>, vector<8x32xf32>
    %c0_2 = arith.constant 0 : index
    %c0_3 = arith.constant 0 : index
    %4 = vector.load %arg4[%c0_2, %c0_3] : memref<32x256xf32, #tpu.memory_space<vmem>>, vector<32x256xf32>
    %cst = arith.constant dense<0.000000e+00> : vector<8x256xf32>
    %5 = tpu.matmul %3, %4, %cst {dimension_numbers = #tpu.dot_dimension_numbers<[1], [0], [0], [1], [0, 0, 1, 1], [], []>} : vector<8x32xf32>, vector<32x256xf32>, vector<8x256xf32> -> vector<8x256xf32>
    %c0_4 = arith.constant 0 : index
    %c0_5 = arith.constant 0 : index
    %6 = vector.load %arg5[%c0_4, %c0_5] : memref<1x256xf32, #tpu.memory_space<vmem>>, vector<1x256xf32>
    %7 = vector.broadcast %6 : vector<1x256xf32> to vector<8x256xf32>
    %8 = arith.addf %5, %7 : vector<8x256xf32>
    %cst_6 = arith.constant 0.000000e+00 : f32
    %9 = vector.broadcast %cst_6 : f32 to vector<8x1xf32>
    %10 = vector.extract_strided_slice %8 {offsets = [0, 0], sizes = [8, 128], strides = [1, 1]} : vector<8x256xf32> to vector<8x128xf32>
    %11 = tpu.iota {dimensions = array<i32: 1>} : vector<8x128xi32>
    %cst_7 = arith.constant dense<0xFF800000> : vector<8xf32>
    %12 = vector.multi_reduction <maximumf>, %10, %cst_7 [1] : vector<8x128xf32> to vector<8xf32>
    %13 = vector.shape_cast %12 : vector<8xf32> to vector<8x1xf32>
    %14 = vector.broadcast %13 : vector<8x1xf32> to vector<8x128xf32>
    %15 = arith.subf %10, %14 : vector<8x128xf32>
    %16 = math.exp %15 : vector<8x128xf32>
    %cst_8 = arith.constant dense<0.000000e+00> : vector<8xf32>
    %17 = vector.multi_reduction <add>, %16, %cst_8 [1] : vector<8x128xf32> to vector<8xf32>
    %18 = vector.shape_cast %17 : vector<8xf32> to vector<8x1xf32>
    %19 = math.log %18 : vector<8x1xf32>
    %20 = arith.addf %13, %19 : vector<8x1xf32>
    %c0_9 = arith.constant 0 : index
    %c0_10 = arith.constant 0 : index
    %21 = vector.load %arg6[%c0_9, %c0_10] : memref<8x3xi32, #tpu.memory_space<vmem>>, vector<8x1xi32>
    %22 = vector.broadcast %21 : vector<8x1xi32> to vector<8x128xi32>
    %23 = arith.cmpi eq, %11, %22 : vector<8x128xi32>
    %cst_11 = arith.constant 0.000000e+00 : f32
    %24 = vector.broadcast %cst_11 : f32 to vector<8x128xf32>
    %25 = arith.select %23, %10, %24 : vector<8x128xi1>, vector<8x128xf32>
    %cst_12 = arith.constant dense<0.000000e+00> : vector<8xf32>
    %26 = vector.multi_reduction <add>, %25, %cst_12 [1] : vector<8x128xf32> to vector<8xf32>
    %27 = vector.shape_cast %26 : vector<8xf32> to vector<8x1xf32>
    %28 = arith.subf %20, %27 : vector<8x1xf32>
    %29 = arith.addf %9, %28 : vector<8x1xf32>
    %30 = vector.extract_strided_slice %8 {offsets = [0, 128], sizes = [8, 128], strides = [1, 1]} : vector<8x256xf32> to vector<8x128xf32>
    %31 = tpu.iota {dimensions = array<i32: 1>} : vector<8x128xi32>
    %cst_13 = arith.constant dense<0xFF800000> : vector<8xf32>
    %32 = vector.multi_reduction <maximumf>, %30, %cst_13 [1] : vector<8x128xf32> to vector<8xf32>
    %33 = vector.shape_cast %32 : vector<8xf32> to vector<8x1xf32>
    %34 = vector.broadcast %33 : vector<8x1xf32> to vector<8x128xf32>
    %35 = arith.subf %30, %34 : vector<8x128xf32>
    %36 = math.exp %35 : vector<8x128xf32>
    %c0_i32_14 = arith.constant 0 : i32
    %37 = vector.broadcast %c0_i32_14 : i32 to vector<8x128xi32>
    %38 = arith.cmpi sge, %31, %37 : vector<8x128xi32>
    %c16_i32 = arith.constant 16 : i32
    %39 = vector.broadcast %c16_i32 : i32 to vector<8x128xi32>
    %40 = arith.cmpi slt, %31, %39 : vector<8x128xi32>
    %41 = arith.andi %38, %40 : vector<8x128xi1>
    %cst_15 = arith.constant 0.000000e+00 : f32
    %42 = vector.broadcast %cst_15 : f32 to vector<8x128xf32>
    %43 = arith.select %41, %36, %42 : vector<8x128xi1>, vector<8x128xf32>
    %cst_16 = arith.constant dense<0.000000e+00> : vector<8xf32>
    %44 = vector.multi_reduction <add>, %43, %cst_16 [1] : vector<8x128xf32> to vector<8xf32>
    %45 = vector.shape_cast %44 : vector<8xf32> to vector<8x1xf32>
    %46 = math.log %45 : vector<8x1xf32>
    %47 = arith.addf %33, %46 : vector<8x1xf32>
    %c0_17 = arith.constant 0 : index
    %c1 = arith.constant 1 : index
    %48 = vector.load %arg6[%c0_17, %c1] : memref<8x3xi32, #tpu.memory_space<vmem>>, vector<8x1xi32>
    %49 = vector.broadcast %48 : vector<8x1xi32> to vector<8x128xi32>
    %50 = arith.cmpi eq, %31, %49 : vector<8x128xi32>
    %cst_18 = arith.constant 0.000000e+00 : f32
    %51 = vector.broadcast %cst_18 : f32 to vector<8x128xf32>
    %52 = arith.select %50, %30, %51 : vector<8x128xi1>, vector<8x128xf32>
    %cst_19 = arith.constant dense<0.000000e+00> : vector<8xf32>
    %53 = vector.multi_reduction <add>, %52, %cst_19 [1] : vector<8x128xf32> to vector<8xf32>
    %54 = vector.shape_cast %53 : vector<8xf32> to vector<8x1xf32>
    %55 = arith.subf %47, %54 : vector<8x1xf32>
    %56 = arith.addf %29, %55 : vector<8x1xf32>
    %c16_i32_20 = arith.constant 16 : i32
    %57 = vector.broadcast %c16_i32_20 : i32 to vector<8x128xi32>
    %58 = arith.cmpi sge, %31, %57 : vector<8x128xi32>
    %c40_i32 = arith.constant 40 : i32
    %59 = vector.broadcast %c40_i32 : i32 to vector<8x128xi32>
    %60 = arith.cmpi slt, %31, %59 : vector<8x128xi32>
    %61 = arith.andi %58, %60 : vector<8x128xi1>
    %cst_21 = arith.constant 0.000000e+00 : f32
    %62 = vector.broadcast %cst_21 : f32 to vector<8x128xf32>
    %63 = arith.select %61, %36, %62 : vector<8x128xi1>, vector<8x128xf32>
    %cst_22 = arith.constant dense<0.000000e+00> : vector<8xf32>
    %64 = vector.multi_reduction <add>, %63, %cst_22 [1] : vector<8x128xf32> to vector<8xf32>
    %65 = vector.shape_cast %64 : vector<8xf32> to vector<8x1xf32>
    %66 = math.log %65 : vector<8x1xf32>
    %67 = arith.addf %33, %66 : vector<8x1xf32>
    %c0_23 = arith.constant 0 : index
    %c2 = arith.constant 2 : index
    %68 = vector.load %arg6[%c0_23, %c2] : memref<8x3xi32, #tpu.memory_space<vmem>>, vector<8x1xi32>
    %69 = vector.broadcast %68 : vector<8x1xi32> to vector<8x128xi32>
    %70 = arith.cmpi eq, %31, %69 : vector<8x128xi32>
    %cst_24 = arith.constant 0.000000e+00 : f32
    %71 = vector.broadcast %cst_24 : f32 to vector<8x128xf32>
    %72 = arith.select %70, %30, %71 : vector<8x128xi1>, vector<8x128xf32>
    %cst_25 = arith.constant dense<0.000000e+00> : vector<8xf32>
    %73 = vector.multi_reduction <add>, %72, %cst_25 [1] : vector<8x128xf32> to vector<8xf32>
    %74 = vector.shape_cast %73 : vector<8xf32> to vector<8x1xf32>
    %75 = arith.subf %67, %74 : vector<8x1xf32>
    %76 = arith.addf %56, %75 : vector<8x1xf32>
    %c0_26 = arith.constant 0 : index
    %77 = memref.load %arg2[%c0_26] : memref<1xi32, #tpu.memory_space<smem>>
    %c1_i32 = arith.constant 1 : i32
    %78 = arith.muli %arg0, %c1_i32 : i32
    %79 = arith.addi %78, %arg1 : i32
    %c8_i32 = arith.constant 8 : i32
    %80 = arith.muli %79, %c8_i32 : i32
    %81 = tpu.iota {dimensions = array<i32: 0>} : vector<8x1xi32>
    %82 = vector.broadcast %80 : i32 to vector<8x1xi32>
    %83 = arith.addi %82, %81 : vector<8x1xi32>
    %84 = vector.broadcast %77 : i32 to vector<8x1xi32>
    %85 = arith.cmpi slt, %83, %84 : vector<8x1xi32>
    %cst_27 = arith.constant 0.000000e+00 : f32
    %86 = vector.broadcast %cst_27 : f32 to vector<8x1xf32>
    %87 = arith.select %85, %76, %86 : vector<8x1xi1>, vector<8x1xf32>
    %c0_28 = arith.constant 0 : index
    %c0_29 = arith.constant 0 : index
    %88 = vector.load %arg7[%c0_28, %c0_29] : memref<8x128xf32, #tpu.memory_space<vmem>>, vector<1x1xf32>
    %cst_30 = arith.constant dense<0.000000e+00> : vector<1xf32>
    %89 = vector.multi_reduction <add>, %87, %cst_30 [0] : vector<8x1xf32> to vector<1xf32>
    %90 = vector.shape_cast %89 : vector<1xf32> to vector<1x1xf32>
    %91 = arith.addf %88, %90 : vector<1x1xf32>
    %c0_31 = arith.constant 0 : index
    %c0_32 = arith.constant 0 : index
    %92 = vector.load %arg7[%c0_31, %c0_32] : memref<8x128xf32, #tpu.memory_space<vmem>>, vector<1x1xf32>
    tpu.vector_store %arg7[%c0_31, %c0_32], %91 {strides = array<i32>} : memref<8x128xf32, #tpu.memory_space<vmem>>, vector<1x1xf32>,
    %c0_i32_33 = arith.constant 0 : i32
    %93 = arith.cmpi eq, %arg1, %c0_i32_33 : i32
    %94 = arith.extui %93 : i1 to i32
    %c0_i32_34 = arith.constant 0 : i32
    %95 = arith.cmpi ne, %94, %c0_i32_34 : i32
    scf.if %95 {
      %96 = arith.sitofp %77 : i32 to f32
      %cst_35 = arith.constant 1.000000e+00 : f32
      %97 = arith.divf %cst_35, %96 : f32
      %c0_36 = arith.constant 0 : index
      %c0_37 = arith.constant 0 : index
      %98 = vector.load %arg7[%c0_36, %c0_37] : memref<8x128xf32, #tpu.memory_space<vmem>>, vector<1x1xf32>
      %99 = vector.broadcast %97 : f32 to vector<1x1xf32>
      %100 = arith.mulf %98, %99 : vector<1x1xf32>
      %c0_38 = arith.constant 0 : index
      %c0_39 = arith.constant 0 : index
      %101 = vector.load %arg7[%c0_38, %c0_39] : memref<8x128xf32, #tpu.memory_space<vmem>>, vector<1x1xf32>
      tpu.vector_store %arg7[%c0_38, %c0_39], %100 {strides = array<i32>} : memref<8x128xf32, #tpu.memory_space<vmem>>, vector<1x1xf32>,
    } else {
    }
    return
  }
  func.func @transform_0(%arg0: i32, %arg1: i32, %arg2: memref<1xi32, #tpu.memory_space<smem>>) -> (i32, i32) {
    %c1_i32 = arith.constant 1 : i32
    %0 = arith.muli %arg0, %c1_i32 : i32
    %1 = arith.addi %0, %arg1 : i32
    %c0_i32 = arith.constant 0 : i32
    %c0_i32_0 = arith.constant 0 : i32
    return %1, %c0_i32 : i32, i32
  }
  func.func @transform_1(%arg0: i32, %arg1: i32, %arg2: memref<1xi32, #tpu.memory_space<smem>>) -> (i32, i32) {
    %c0_i32 = arith.constant 0 : i32
    %c0_i32_0 = arith.constant 0 : i32
    %c0_i32_1 = arith.constant 0 : i32
    return %c0_i32, %c0_i32_0 : i32, i32
  }
  func.func @transform_2(%arg0: i32, %arg1: i32, %arg2: memref<1xi32, #tpu.memory_space<smem>>) -> (i32, i32) {
    %c0_i32 = arith.constant 0 : i32
    %c0_i32_0 = arith.constant 0 : i32
    %c0_i32_1 = arith.constant 0 : i32
    return %c0_i32, %c0_i32_0 : i32, i32
  }
  func.func @transform_3(%arg0: i32, %arg1: i32, %arg2: memref<1xi32, #tpu.memory_space<smem>>) -> (i32, i32) {
    %c1_i32 = arith.constant 1 : i32
    %0 = arith.muli %arg0, %c1_i32 : i32
    %1 = arith.addi %0, %arg1 : i32
    %c0_i32 = arith.constant 0 : i32
    %c0_i32_0 = arith.constant 0 : i32
    return %1, %c0_i32 : i32, i32
  }
  func.func @transform_4(%arg0: i32, %arg1: i32, %arg2: memref<1xi32, #tpu.memory_space<smem>>) -> (i32, i32) {
    %c0_i32 = arith.constant 0 : i32
    %c0_i32_0 = arith.constant 0 : i32
    return %arg0, %c0_i32 : i32, i32
  }
}

</mosaic_0001>

<llo_original>
// kernel: a_call__.1
$region0: #{a_call__.1}
  #allocation0 [shape = 'u32[]', space=smem, size = 0x4, offset = 0x4, fixed_abs, tag = 'smem constant byte address 0x4 - core index']
  #allocation1 [shape = 'u32[144,128]{1,0:T(1,128)}', space=vmem, size = 0x12000, scoped, tag = 'internal scratch']
  #allocation2 [shape = 's32[1]{0}', space=sflag, size = 0x4, scoped, tag = 'scoped memory for a_call__.1']
  #allocation3 [shape = 's32[1]{0:T(128)S(6)}', space=smem, size = 0x200, scoped, tag = 'prefetched SMEM operand 0']
  %s0 = inlined_call_operand.<no memory space> [shape: s32[1], index: 0, kind: input, shape index: {}]
  %s1 = inlined_call_operand.vmem [shape: f32[8,32], index: 1, kind: input, shape index: {}]
  %s2 = inlined_call_operand.vmem [shape: f32[32,256], index: 2, kind: input, shape index: {}]
  %s3 = inlined_call_operand.vmem [shape: f32[1,256], index: 3, kind: input, shape index: {}]
  %s4 = inlined_call_operand.vmem [shape: s32[8,3], index: 4, kind: input, shape index: {}]
  %s5 = inlined_call_operand.vmem [shape: f32[8,128], index: 5, kind: output, shape index: {}]
  %s6 = sld [smem:[#allocation0]]
  $region34: #{a_call__.1} parent=0
    _
  %s8 = ssub.s32 1, %s6
  %s9 = scalar_select 0, %s8, %s6
  %10 = sst [smem:[#allocation3]] %s0
  // Predicated region
  $region2: #{a_call__.1} parent=0 // pred_check
    _
  $region3: #{a_call__.1} parent=0 // pred_check_branch
    %12 = sbr.rel (0) target = $region5
  $region4: #{a_call__.1} parent=0 // pred_region
    %s13 = sadd.s32 0, 0
    %p14 = scmp.lt.s32.totalorder %s13, 0
    %s15 = scalar_select %p14, %s13, 0
    %s16 = smul.addr %s15, 8
    %s17 = scalar_lea.vmem %s1, %s16
    %s18 = sadd.s32 0, 0
  $region5: #{a_call__.1} parent=0 // pred_fallthru
    _
  // Predicated region
  $region6: #{a_call__.1} parent=0 // pred_check
    _
  $region7: #{a_call__.1} parent=0 // pred_check_branch
    %20 = sbr.rel (0) target = $region9
  $region8: #{a_call__.1} parent=0 // pred_region
    _
  $region9: #{a_call__.1} parent=0 // pred_fallthru
    _
  // Predicated region
  $region10: #{a_call__.1} parent=0 // pred_check
    _
  $region11: #{a_call__.1} parent=0 // pred_check_branch
    %22 = sbr.rel (0) target = $region13
  $region12: #{a_call__.1} parent=0 // pred_region
    _
  $region13: #{a_call__.1} parent=0 // pred_fallthru
    _
  // Predicated region
  $region14: #{a_call__.1} parent=0 // pred_check
    _
  $region15: #{a_call__.1} parent=0 // pred_check_branch
    %24 = sbr.rel (0) target = $region17
  $region16: #{a_call__.1} parent=0 // pred_region
    %s25 = sadd.s32 0, 0
    %p26 = scmp.lt.s32.totalorder %s25, 0
    %s27 = scalar_select %p26, %s25, 0
    %s28 = smul.addr %s27, 8
    %s29 = scalar_lea.vmem %s4, %s28
    %s30 = sadd.s32 0, 0
  $region17: #{a_call__.1} parent=0 // pred_fallthru
    _
  %s31 = sadd.s32 0, 0
  %p32 = scmp.lt.s32.totalorder %s31, 0
  %s33 = scalar_select %p32, %s31, 0
  %s34 = smul.addr %s33, 8
  %s35 = scalar_lea.vmem %s1, %s34
  %s36 = sadd.s32 0, 0
  %p37 = scmp.lt.s32.totalorder %s36, 0
  %s38 = scalar_select %p37, %s36, 0
  %s39 = smul.addr %s38, 8
  %s40 = scalar_lea.vmem %s4, %s39
  %s41 = sadd.s32 0, 0
  %p42 = scmp.lt.s32.totalorder %s41, 0
  %s43 = scalar_select %p42, %s41, 0
  %s44 = smul.addr %s43, 8
  %s45 = scalar_lea.vmem %s1, %s44
  %s46 = sadd.s32 0, 0
  %s47 = sadd.s32 0, 0
  %p48 = scmp.lt.s32.totalorder %s47, 0
  %s49 = scalar_select %p48, %s47, 0
  %s50 = smul.addr %s49, 8
  %s51 = scalar_lea.vmem %s4, %s50
  %s52 = sadd.s32 0, 0
  %p53 = scmp.eq.s32.totalorder 0, 0
  // Predicated region
  $region18: #{a_call__.1} parent=0 // pred_check
    %p54 = pneg %p53
  $region19: #{a_call__.1} parent=0 // pred_check_branch
    %56 = sbr.rel (%p54) target = $region21
  $region20: #{a_call__.1} parent=0 // pred_region
    %57 = vst [vmem:[%s5] sm:$0xff] 0.0
  $region21: #{a_call__.1} parent=0 // pred_fallthru
    _
  %v58 = vld [vmem:[%s45] sm:$0xff]
  %v59 = vld [vmem:[%s2] sm:$0xff]
  %v60 = vld [vmem:[%s2 + $0x8] sm:$0xff]
  %v61 = vld [vmem:[%s2 + $0x10] sm:$0xff]
  %v62 = vld [vmem:[%s2 + $0x18] sm:$0xff]
  %v63 = vld [vmem:[%s2 + $0x20] sm:$0xff]
  %v64 = vld [vmem:[%s2 + $0x28] sm:$0xff]
  %v65 = vld [vmem:[%s2 + $0x30] sm:$0xff]
  %v66 = vld [vmem:[%s2 + $0x38] sm:$0xff]
  %v67 = vld [vmem:[%s3] sm:$0x3]
  %v69 = vlaneseq
  %v70 = vshrl.u32 %v69, 7
  %v71 = vsub.s32 0, %v70
  %v72 = vrot.slane %v67, %v71
  %v73 = vlaneseq
  %v74 = vshrl.u32 %v73, 7
  %v75 = vsub.s32 1, %v74
  %v76 = vrot.slane %v67, %v75
  %vm79 = vcmask 261120
  %v81 = vsel %vm79, %v58, 0
  %83 = vmatprep.subr.mxu0 %v60
  %84 = vmatpush1.msra.mxu0 %v59
  %85 = vmatprep.subr.mxu0 %v62
  %86 = vmatpush1.msra.mxu0 %v61
  %87 = vmatprep.subr.mxu0 %v64
  %88 = vmatpush1.msra.mxu0 %v63
  %89 = vmatprep.subr.mxu0 %v66
  %90 = vmatpush1.msra.mxu0 %v65
  %91 = vmatprep.subr.mxu0 0.0
  %92 = vmatpush1.msra.mxu0 0.0
  %93 = vmatprep.subr.mxu0 0.0
  %94 = vmatpush1.msra.mxu0 0.0
  %95 = vmatprep.subr.mxu0 0.0
  %96 = vmatpush1.msra.mxu0 0.0
  %97 = vmatprep.subr.mxu0 0.0
  %98 = vmatpush1.msra.mxu0 0.0
  %99 = vmatprep.subr.mxu0 0.0
  %100 = vmatpush1.msra.mxu0 0.0
  %101 = vmatprep.subr.mxu0 0.0
  %102 = vmatpush1.msra.mxu0 0.0
  %103 = vmatprep.subr.mxu0 0.0
  %104 = vmatpush1.msra.mxu0 0.0
  %105 = vmatprep.subr.mxu0 0.0
  %106 = vmatpush1.msra.mxu0 0.0
  %107 = vmatprep.subr.mxu0 0.0
  %108 = vmatpush1.msra.mxu0 0.0
  %109 = vmatprep.subr.mxu0 0.0
  %110 = vmatpush1.msra.mxu0 0.0
  %111 = vmatprep.subr.mxu0 0.0
  %112 = vmatpush1.msra.mxu0 0.0
  %113 = vmatprep.subr.mxu0 0.0
  %114 = vmatpush1.msra.mxu0 0.0
  %115 = vmatprep.subr.mxu0 0.0
  %116 = vmatpush1.msra.mxu0 0.0
  %117 = vmatprep.subr.mxu0 0.0
  %118 = vmatpush1.msra.mxu0 0.0
  %119 = vmatprep.subr.mxu0 0.0
  %120 = vmatpush1.msra.mxu0 0.0
  %121 = vmatprep.subr.mxu0 0.0
  %122 = vmatpush1.msra.mxu0 0.0
  %123 = vmatprep.subr.mxu0 0.0
  %124 = vmatpush1.msra.mxu0 0.0
  %125 = vmatprep.subr.mxu0 0.0
  %126 = vmatpush1.msra.mxu0 0.0
  %127 = vmatprep.subr.mxu0 0.0
  %128 = vmatpush1.msra.mxu0 0.0
  %129 = vmatprep.subr.mxu0 0.0
  %130 = vmatpush1.msra.mxu0 0.0
  %131 = vmatprep.subr.mxu0 0.0
  %132 = vmatpush1.msra.mxu0 0.0
  %133 = vmatprep.subr.mxu0 0.0
  %134 = vmatpush1.msra.mxu0 0.0
  %135 = vmatprep.subr.mxu0 0.0
  %136 = vmatpush1.msra.mxu0 0.0
  %137 = vmatprep.subr.mxu0 0.0
  %138 = vmatpush1.msra.mxu0 0.0
  %139 = vmatprep.subr.mxu0 0.0
  %140 = vmatpush1.msra.mxu0 0.0
  %141 = vmatprep.subr.mxu0 0.0
  %142 = vmatpush1.msra.mxu0 0.0
  %143 = vmatprep.subr.mxu0 0.0
  %144 = vmatpush1.msra.mxu0 0.0
  %145 = vmatprep.subr.mxu0 0.0
  %146 = vmatpush1.msra.mxu0 0.0
  %147 = vmatprep.mubr.f32.mxu0 0.0
  %148 = vmatmul.mubr.f32.gmra.mrb[0].mxu0 %v81
  %v149 = vpop.f32.mrb[0].mxu0
  %v150 = vadd.f32 %v72, %v149
  %v151 = vpop.f32.mrb[0].mxu0
  %v152 = vadd.f32 %v76, %v151
  %153 = vdwg.mxu0
  %v154 = vlaneseq
  %v155 = vand.u32 %v154, 127
  %156 = vmax.xlane.f32.xlu0 %v150
  %v157 = vpop.xlane.xlu0 %156
  %v158 = vsub.f32 %v150, %v157
  %v159 = vmul.f32 %v158, 1.442695
  %v160 = vpow.pop %v159
  %161 = vadd.xlane.f32.xlu0 %v160
  %v162 = vpop.xlane.xlu0 %161
  %v163 = vlog2.pop %v162
  %v164 = vmul.f32 %v163, 0.6931472
  %v165 = vadd.f32 %v157, %v164
  %v166 = vld [vmem:[%s51] sm:$0xff]
  %167 = vset.pattern.permute.xlu0 0
  %168 = vperm.xlu0 %167, %v166
  %v169 = vpop.permute.xlu0 %168
  %vm170 = vcmp.eq.s32.totalorder %v155, %v169
  %v171 = vsel %vm170, %v150, 0.0
  %172 = vadd.xlane.f32.xlu0 %v171
  %v173 = vpop.xlane.xlu0 %172
  %v174 = vsub.f32 %v165, %v173
  %v175 = vadd.f32 %v174, 0.0
  %176 = vmax.xlane.f32.xlu0 %v152
  %v177 = vpop.xlane.xlu0 %176
  %v178 = vsub.f32 %v152, %v177
  %v179 = vmul.f32 %v178, 1.442695
  %v180 = vpow.pop %v179
  %vm181 = vcmp.ge.s32.totalorder %v155, 0
  %vm182 = vcmp.lt.s32.totalorder %v155, 16
  %vm183 = vmand %vm181, %vm182
  %v184 = vsel %vm183, %v180, 0.0
  %185 = vadd.xlane.f32.xlu0 %v184
  %v186 = vpop.xlane.xlu0 %185
  %v187 = vlog2.pop %v186
  %v188 = vmul.f32 %v187, 0.6931472
  %v189 = vadd.f32 %v177, %v188
  %190 = vset.pattern.permute.xlu0 1
  %191 = vperm.xlu0 %190, %v166
  %v192 = vpop.permute.xlu0 %191
  %vm193 = vcmp.eq.s32.totalorder %v155, %v192
  %v194 = vsel %vm193, %v152, 0.0
  %195 = vadd.xlane.f32.xlu0 %v194
  %v196 = vpop.xlane.xlu0 %195
  %v197 = vsub.f32 %v189, %v196
  %v198 = vadd.f32 %v175, %v197
  %vm199 = vcmp.ge.s32.totalorder %v155, 16
  %vm200 = vcmp.lt.s32.totalorder %v155, 40
  %vm201 = vmand %vm199, %vm200
  %v202 = vsel %vm201, %v180, 0.0
  %203 = vadd.xlane.f32.xlu0 %v202
  %v204 = vpop.xlane.xlu0 %203
  %v205 = vlog2.pop %v204
  %v206 = vmul.f32 %v205, 0.6931472
  %v207 = vadd.f32 %v177, %v206
  %208 = vset.pattern.permute.xlu0 2
  %209 = vperm.xlu0 %208, %v166
  %v210 = vpop.permute.xlu0 %209
  %vm211 = vcmp.eq.s32.totalorder %v155, %v210
  %v212 = vsel %vm211, %v152, 0.0
  %213 = vadd.xlane.f32.xlu0 %v212
  %v214 = vpop.xlane.xlu0 %213
  %v215 = vsub.f32 %v207, %v214
  %v216 = vadd.f32 %v198, %v215
  %s217 = sld [smem:[#allocation3]]
  %s218 = sadd.s32 0, 0
  %s219 = smul.u32 %s218, 8
  %v220 = vlaneseq
  %v221 = vshrl.u32 %v220, 7
  %v222 = vstv %s219
  %v223 = vadd.s32 %v222, %v221
  %v224 = vstv %s217
  %vm225 = vcmp.lt.s32.totalorder %v223, %v224
  %v226 = vsel %vm225, %v216, 0.0
  %v227 = vld [vmem:[%s5] sm:$0x1]
  %v228 = vrot.slane %v226, 4
  %v229 = vadd.f32 %v226, %v228
  %v230 = vrot.slane %v229, 2
  %v231 = vadd.f32 %v229, %v230
  %v232 = vrot.slane %v231, 1
  %v233 = vadd.f32 %v231, %v232
  %v234 = vadd.f32 %v227, %v233
  %vm235 = vcmask 0
  %236 = vst.msk [vmem:[%s5] sm:$0x1] %vm235, %v234
  // Predicated region
  $region22: #{a_call__.1} parent=0 // pred_check
    %p237 = pneg %p53
  $region23: #{a_call__.1} parent=0 // pred_check_branch
    %239 = sbr.rel (%p237) target = $region25
  $region24: #{a_call__.1} parent=0 // pred_region
    %s240 = scvt.s32.f32 %s217
    %v241 = vstv %s240
    %v242 = vrcp.pop %v241
    %s243 = vtos %v242
    %v244 = vld [vmem:[%s5] sm:$0x1]
    %v245 = vstv %s243
    %v246 = vmul.f32 %v244, %v245
    %247 = vst.msk [vmem:[%s5] sm:$0x1] %vm235, %v246
  $region25: #{a_call__.1} parent=0 // pred_fallthru
    _
  // Predicated region
  $region26: #{a_call__.1} parent=0 // pred_check
    _
  $region27: #{a_call__.1} parent=0 // pred_check_branch
    %249 = sbr.rel (0) target = $region29
  $region28: #{a_call__.1} parent=0 // pred_region
    _
  $region29: #{a_call__.1} parent=0 // pred_fallthru
    _
  // Predicated region
  $region30: #{a_call__.1} parent=0 // pred_check
    _
  $region31: #{a_call__.1} parent=0 // pred_check_branch
    %251 = sbr.rel (0) target = $region33
  $region32: #{a_call__.1} parent=0 // pred_region
    _
  $region33: #{a_call__.1} parent=0 // pred_fallthru
    _

</llo_original>
